<compile_context>
chip_gen: v7x
topology: tpu7x:2x2x1
jax: 0.10.0
libtpu: 0.0.40
codegen_flags: <defaults>
</compile_context>

<pallas_src>
import functools
import math

import jax
import jax.numpy as jnp
import numpy as np
from jax import lax
from jax.experimental import pallas as pl
from jax.experimental.pallas import tpu as pltpu

EPS = 1e-5  # nn.BatchNorm3d default


# --------------------------- tiling / VMEM helpers -------------------------- #

def _vmem_capacity_bytes():
    """Per-core VMEM capacity; falls back to the most conservative chip (v7x)."""
    try:
        info = pltpu.get_tpu_info()
        cap = getattr(info, "vmem_capacity_bytes", None)
        if cap:
            return int(cap)
    except Exception:
        pass
    return 64 << 20


def _aligned_d_tiles(d):
    """D tile sizes that divide d and keep blocks sublane-aligned: multiples of
    8, plus the full extent d itself."""
    cands = [dt for dt in range(8, d + 1, 8) if d % dt == 0]
    if d not in cands:
        cands.append(d)
    return sorted(cands)


def _pick_dt(d, bytes_per_plane, vmem_cap, max_planes):
    """Largest aligned D tile whose pipelined working set fits ~37% of VMEM."""
    budget = (3 * vmem_cap) // 8
    chosen = None
    for dt in _aligned_d_tiles(d):
        if dt <= max_planes and dt * bytes_per_plane <= budget:
            chosen = dt
    return chosen if chosen is not None else _aligned_d_tiles(d)[0]


def _compiler_params(working_set_bytes, vmem_cap, semantics):
    params = dict(dimension_semantics=semantics)
    # Only raise the scoped-VMEM limit when the working set might exceed the
    # most conservative default; never request more than ~75% of the chip's
    # physical VMEM (headroom for internal scratch, critical on v7x's 64 MiB).
    if working_set_bytes > (12 << 20):
        params["vmem_limit_bytes"] = int(
            min(max(2 * working_set_bytes, 32 << 20), (3 * vmem_cap) // 4))
    return params


# ----------------------------- Pallas kernels ------------------------------ #

def _bn_stats_kernel(x_ref, sum_ref, sq_ref):
    """Per-(N, C, lane) partial sums over one D-slab (lane-dense, W*H on lanes).

    x_ref:   (1, C, Dt, HW)   one D-slab of one batch element
    sum_ref: (1, C, HW)       per-N running sum   (accumulated over the D axis)
    sq_ref:  (1, C, HW)       per-N running sumsq
    """
    @pl.when(pl.program_id(1) == 0)
    def _init():
        sum_ref[...] = jnp.zeros_like(sum_ref)
        sq_ref[...] = jnp.zeros_like(sq_ref)

    x = x_ref[0].astype(jnp.float32)          # (C, Dt, HW)
    sum_ref[0] += jnp.sum(x, axis=1)          # (C, HW)
    sq_ref[0] += jnp.sum(x * x, axis=1)


def _fused_bn_relu_conv_kernel(x_mid_ref, x_prev_ref, x_next_ref,
                               scale_ref, shift_ref, w_ref, b_ref,
                               o_ref, acc_ref, *, H, W):
    """Fused BN(scale, shift) + ReLU + zero-pad + 3x3x3 conv for all heads.

    x_mid_ref : (1, C, Dt, HW)   current D-slab (HW = H*W, lane-dense)
    x_prev_ref: (1, C, Dt, HW)   neighbouring slab below (clamped); only its
                                 LAST plane is used, masked at the volume edge
    x_next_ref: (1, C, Dt, HW)   neighbouring slab above (clamped); only its
                                 FIRST plane is used, masked at the volume edge
    scale_ref : SMEM (C,)        gamma / sqrt(var + eps)
    shift_ref : SMEM (C,)        beta - mean * scale
    w_ref     : SMEM (Cout*C*27,) weights, flat index = (co*C + ci)*27 + tap
    b_ref     : SMEM (Cout,)     bias
    o_ref     : (1, Cout, Dt, HW)  lane-dense, unmasked stores
    acc_ref   : VMEM (Cout, Dt, HW) f32 accumulator scratch
    """
    _, C, Dt, HW = x_mid_ref.shape
    Cout = o_ref.shape[1]

    db = pl.program_id(1)
    prev_m = jnp.where(db == 0, 0.0, 1.0)                       # volume boundary
    next_m = jnp.where(db == pl.num_programs(1) - 1, 0.0, 1.0)

    # ---- hoisted, grid-step-invariant boundary masks (built once) --------- #
    col = lax.broadcasted_iota(jnp.int32, (Dt, HW), 1)
    hpos = col // W
    wpos = col - hpos * W
    h_ok = ((hpos >= 1), None, (hpos <= H - 2))                 # dh = -1, 0, +1
    w_ok = ((wpos >= 1), None, (wpos <= W - 2))                 # dw = -1, 0, +1
    masks = []
    for kh in range(3):
        row = []
        for kw in range(3):
            mh, mw = h_ok[kh], w_ok[kw]
            if mh is None and mw is None:
                row.append(None)
            elif mh is None:
                row.append(mw.astype(jnp.float32))
            elif mw is None:
                row.append(mh.astype(jnp.float32))
            else:
                row.append(jnp.logical_and(mh, mw).astype(jnp.float32))
        masks.append(row)
    drow = lax.broadcasted_iota(jnp.int32, (Dt, HW), 0)
    is_d_first = drow == 0
    is_d_last = drow == Dt - 1

    # ---- bias init of the f32 VMEM accumulators --------------------------- #
    for co in range(Cout):
        acc_ref[co] = jnp.full((Dt, HW), b_ref[co], jnp.float32)

    # ---- per input channel: BN + ReLU, then 27-tap shifted-add conv ------- #
    for ci in range(C):
        sc = scale_ref[ci]
        sh = shift_ref[ci]
        mid = jnp.maximum(x_mid_ref[0, ci].astype(jnp.float32) * sc + sh, 0.0)
        prv = jnp.maximum(
            x_prev_ref[0, ci, pl.ds(Dt - 1, 1), :].astype(jnp.float32) * sc + sh,
            0.0) * prev_m                                       # (1, HW)
        nxt = jnp.maximum(
            x_next_ref[0, ci, pl.ds(0, 1), :].astype(jnp.float32) * sc + sh,
            0.0) * next_m                                       # (1, HW)

        # D-shifted variants: up[d] = y[d-1], down[d] = y[d+1]; boundary plane
        # comes from the neighbouring slab (zeroed at the volume edges), which
        # reproduces the conv's zero padding of the post-activation tensor.
        up = jnp.where(is_d_first, prv, pltpu.roll(mid, shift=1, axis=0))
        down = jnp.where(is_d_last, nxt,
                         pltpu.roll(mid, shift=(Dt - 1) % Dt, axis=0))
        dvars = (up, mid, down)

        accs = [acc_ref[co] for co in range(Cout)]
        for kd in range(3):
            base = dvars[kd]
            for kh in range(3):
                for kw in range(3):
                    off = (kh - 1) * W + (kw - 1)
                    # operand[j] = y_shifted[j + off]  (lane roll on the XLU)
                    op = base if off == 0 else pltpu.roll(
                        base, shift=(-off) % HW, axis=1)
                    m = masks[kh][kw]
                    if m is not None:
                        op = op * m                     # zero out-of-range taps
                    tap = (kd * 3 + kh) * 3 + kw
                    for co in range(Cout):
                        accs[co] = accs[co] + w_ref[(co * C + ci) * 27 + tap] * op
        for co in range(Cout):
            acc_ref[co] = accs[co]

    for co in range(Cout):
        o_ref[0, co] = acc_ref[co].astype(o_ref.dtype)


# ------------------------------ JAX wrappers -------------------------------- #

def bn_batch_stats(x4):
    """Training-mode BatchNorm3d batch mean / (biased) variance per channel.

    x4: (N, C, D, H*W) lane-dense view of the NCDHW input.
    """
    n, c, d, hw = x4.shape
    itemsize = x4.dtype.itemsize
    vmem_cap = _vmem_capacity_bytes()
    dt = _pick_dt(d, bytes_per_plane=2 * c * hw * itemsize,
                  vmem_cap=vmem_cap, max_planes=256)
    params = _compiler_params(2 * c * dt * hw * itemsize, vmem_cap,
                              ("parallel", "arbitrary"))

    sums, sqs = pl.pallas_call(
        _bn_stats_kernel,
        grid=(n, d // dt),
        in_specs=[pl.BlockSpec((1, c, dt, hw), lambda i, j: (i, 0, j, 0))],
        out_specs=(pl.BlockSpec((1, c, hw), lambda i, j: (i, 0, 0)),
                   pl.BlockSpec((1, c, hw), lambda i, j: (i, 0, 0))),
        out_shape=(jax.ShapeDtypeStruct((n, c, hw), jnp.float32),
                   jax.ShapeDtypeStruct((n, c, hw), jnp.float32)),
        compiler_params=pltpu.CompilerParams(**params),
    )(x4)

    cnt = n * d * hw
    mean = jnp.sum(sums, axis=(0, 2)) / cnt
    # E[x^2] - E[x]^2 in f32; clamp guards tiny negatives from cancellation.
    # TODO(synk): use a two-pass / Welford accumulation if inputs may have
    # |mean| >> std (catastrophic cancellation).
    var = jnp.maximum(jnp.sum(sqs, axis=(0, 2)) / cnt - mean * mean, 0.0)
    return mean, var


def fused_bn_relu_conv(x4, scale, shift, w_flat, bias, cout_total, h, w,
                       max_d_planes=16):
    """Single fused pass: BN(scale,shift) + ReLU + 3x3x3 'same' conv, all heads.

    x4: (N, C, D, H*W) lane-dense view; returns (N, Cout_total, D, H*W).
    """
    n, c, d, hw = x4.shape
    itemsize = x4.dtype.itemsize
    vmem_cap = _vmem_capacity_bytes()
    # Per-plane footprint: 3 double-buffered input slabs (mid + 2 halo slabs),
    # the double-buffered output slab, and the f32 accumulator scratch.
    plane_bytes = 2 * (3 * c + cout_total) * hw * itemsize + cout_total * hw * 4
    # max_d_planes caps register pressure of the fully-unrolled 27-tap loop
    # (~16 live (Dt, HW) f32 arrays -> Dt=16 stays well inside 64 vregs).
    dt = _pick_dt(d, plane_bytes, vmem_cap, max_planes=max_d_planes)
    nd = d // dt
    params = _compiler_params(dt * plane_bytes, vmem_cap,
                              ("parallel", "parallel"))

    smem = pl.BlockSpec(memory_space=pltpu.MemorySpace.SMEM)

    def mid_map(i, j):
        return (i, 0, j, 0)

    def prev_map(i, j):   # neighbouring slab below; kernel uses its last plane
        return (i, 0, jnp.maximum(j - 1, 0), 0)

    def next_map(i, j):   # neighbouring slab above; kernel uses its first plane
        return (i, 0, jnp.minimum(j + 1, nd - 1), 0)

    kernel = functools.partial(_fused_bn_relu_conv_kernel, H=h, W=w)
    return pl.pallas_call(
        kernel,
        grid=(n, nd),
        in_specs=[
            pl.BlockSpec((1, c, dt, hw), mid_map),
            pl.BlockSpec((1, c, dt, hw), prev_map),
            pl.BlockSpec((1, c, dt, hw), next_map),
            smem, smem, smem, smem,
        ],
        out_specs=pl.BlockSpec((1, cout_total, dt, hw), mid_map),
        out_shape=jax.ShapeDtypeStruct((n, cout_total, d, hw), x4.dtype),
        scratch_shapes=[pltpu.VMEM((cout_total, dt, hw), jnp.float32)],
        compiler_params=pltpu.CompilerParams(**params),
    )(x4, x4, x4, scale, shift, w_flat, bias)


class OutputBlockPallas:
    """Pallas port of RSUNet3.OutputBlock (kernel_size must be 3)."""

    def __init__(self, in_channels, out_spec, kernel_size, key):
        assert kernel_size == 3, "only the 3x3x3 'same' case is implemented"
        self.in_channels = in_channels
        self.keys = sorted(out_spec.keys())
        self.max_d_planes = 16   # register-pressure cap for the conv pass tile

        # BatchNorm3d parameters (PyTorch default init: gamma=1, beta=0).
        self.gamma = jnp.ones((in_channels,), jnp.float32)
        self.beta = jnp.zeros((in_channels,), jnp.float32)

        # One Conv head per out_spec entry (kaiming_normal_ 'relu', bias=0),
        # concatenated along Cout so ONE fused kernel computes every head.
        fan_in = in_channels * 27
        std = math.sqrt(2.0 / fan_in)
        ws, bs, self.head_channels = [], [], []
        for k in self.keys:
            cout = out_spec[k][-4]
            key, wk = jax.random.split(key)
            wgt = jax.random.normal(wk, (cout, in_channels, 3, 3, 3),
                                    jnp.float32) * std
            ws.append(wgt)
            bs.append(jnp.zeros((cout,), jnp.float32))
            self.head_channels.append(int(cout))
        self.w_all = jnp.concatenate(ws, axis=0)      # (Cout_total, Cin, 3, 3, 3)
        self.b_all = jnp.concatenate(bs, axis=0)      # (Cout_total,)
        self.w_flat = self.w_all.reshape(-1)          # (Cout_total*Cin*27,)
        self.cout_total = int(self.w_all.shape[0])

    def __call__(self, x_ncdhw):
        n, c, d, h, w = x_ncdhw.shape
        x4 = x_ncdhw.reshape(n, c, d, h * w)          # free, lane-dense view

        mean, var = bn_batch_stats(x4)
        scale = self.gamma / jnp.sqrt(var + EPS)
        shift = self.beta - mean * scale

        out4 = fused_bn_relu_conv(x4, scale, shift, self.w_flat, self.b_all,
                                  self.cout_total, h, w,
                                  max_d_planes=self.max_d_planes)
        out = out4.reshape(n, self.cout_total, d, h, w)

        outs, o0 = [], 0
        for cc in self.head_channels:
            outs.append(out[:, o0:o0 + cc])           # NCDHW, per head
            o0 += cc
        return outs
        # TODO(synk): BatchNorm3d running_mean/running_var momentum updates are
        # a stateful training-mode side effect and are not reproduced here.


# --------------------------- pure-JAX reference ----------------------------- #

def _reference(x_ncdhw, block):
    x = x_ncdhw.astype(jnp.float32)
    mean = jnp.mean(x, axis=(0, 2, 3, 4), keepdims=True)
    var = jnp.mean((x - mean) ** 2, axis=(0, 2, 3, 4), keepdims=True)
    g = block.gamma.reshape(1, -1, 1, 1, 1)
    b = block.beta.reshape(1, -1, 1, 1, 1)
    y = jnp.maximum((x - mean) / jnp.sqrt(var + EPS) * g + b, 0.0)
    outs, o0 = [], 0
    for cc in block.head_channels:
        wgt = block.w_all[o0:o0 + cc]                 # (cc, Cin, 3, 3, 3) OIDHW
        bias = block.b_all[o0:o0 + cc]
        o = jax.lax.conv_general_dilated(
            y, wgt, window_strides=(1, 1, 1), padding="SAME",
            dimension_numbers=("NCDHW", "OIDHW", "NCDHW"),
            precision=jax.lax.Precision.HIGHEST) + bias.reshape(1, -1, 1, 1, 1)
        outs.append(o)
        o0 += cc
    return outs


# ---------------------------------- main ------------------------------------ #

if __name__ == "__main__":
    key = jax.random.PRNGKey(0)
    kx, kp = jax.random.split(key)

    N, C, D, H, W = 2, 4, 16, 8, 16          # H*W = 128 -> exactly lane-dense
    x = jax.random.normal(kx, (N, C, D, H, W), jnp.float32)

    # out_spec values are output shapes (channels, D, H, W); out_channels = v[-4]
    out_spec = {"affinity": (3, D, H, W), "myelin": (1, D, H, W)}

    block = OutputBlockPallas(in_channels=C, out_spec=out_spec, kernel_size=3,
                              key=kp)
    refs = _reference(x, block)

    # Default tiling: full-D slab (dt = 16), halos fully masked.
    outs = block(x)
    outs = [jax.block_until_ready(o) for o in outs]
    for o, r in zip(outs, refs):
        assert o.shape == r.shape, (o.shape, r.shape)
        np.testing.assert_allclose(np.asarray(o), np.asarray(r),
                                   rtol=2e-3, atol=2e-3)

    # Smaller D tile (dt = 8, 2 slabs/batch) to exercise the inter-slab halo.
    block.max_d_planes = 8
    outs2 = block(x)
    outs2 = [jax.block_until_ready(o) for o in outs2]
    for o, r in zip(outs2, refs):
        np.testing.assert_allclose(np.asarray(o), np.asarray(r),
                                   rtol=2e-3, atol=2e-3)

    print("KERNEL_OK")
</pallas_src>

<mosaic_0001>
module attributes {stable_mosaic.version = 11 : i64} {
  func.func @_bn_stats_kernel(%arg0: i32, %arg1: i32, %arg2: memref<1x4x16x128xf32, #tpu.memory_space<vmem>>, %arg3: memref<1x4x128xf32, #tpu.memory_space<vmem>>, %arg4: memref<1x4x128xf32, #tpu.memory_space<vmem>>) attributes {dimension_semantics = [#tpu.dimension_semantics<parallel>, #tpu.dimension_semantics<arbitrary>], iteration_bounds = array<i64: 2, 1>, scalar_prefetch = 0 : i64, scratch_operands = 0 : i64, tpu.core_type = #tpu.core_type<tc>, window_params = [{transform_indices = @transform_0, window_bounds = array<i64: 1, 4, 16, 128>}, {transform_indices = @transform_1, window_bounds = array<i64: 1, 4, 128>}, {transform_indices = @transform_2, window_bounds = array<i64: 1, 4, 128>}]} {
    %c0_i32 = arith.constant 0 : i32
    %0 = arith.cmpi eq, %arg1, %c0_i32 : i32
    %1 = arith.extui %0 : i1 to i32
    %c0_i32_0 = arith.constant 0 : i32
    %2 = arith.cmpi ne, %1, %c0_i32_0 : i32
    scf.if %2 {
      %cst_17 = arith.constant 0.000000e+00 : f32
      %20 = vector.broadcast %cst_17 : f32 to vector<1x4x128xf32>
      %c0_18 = arith.constant 0 : index
      %c0_19 = arith.constant 0 : index
      %c0_20 = arith.constant 0 : index
      %21 = vector.load %arg3[%c0_18, %c0_19, %c0_20] : memref<1x4x128xf32, #tpu.memory_space<vmem>>, vector<1x4x128xf32>
      tpu.vector_store %arg3[%c0_18, %c0_19, %c0_20], %20 {strides = array<i32>} : memref<1x4x128xf32, #tpu.memory_space<vmem>>, vector<1x4x128xf32>,
      %cst_21 = arith.constant 0.000000e+00 : f32
      %22 = vector.broadcast %cst_21 : f32 to vector<1x4x128xf32>
      %c0_22 = arith.constant 0 : index
      %c0_23 = arith.constant 0 : index
      %c0_24 = arith.constant 0 : index
      %23 = vector.load %arg4[%c0_22, %c0_23, %c0_24] : memref<1x4x128xf32, #tpu.memory_space<vmem>>, vector<1x4x128xf32>
      tpu.vector_store %arg4[%c0_22, %c0_23, %c0_24], %22 {strides = array<i32>} : memref<1x4x128xf32, #tpu.memory_space<vmem>>, vector<1x4x128xf32>,
    } else {
    }
    %c0 = arith.constant 0 : index
    %c0_1 = arith.constant 0 : index
    %c0_2 = arith.constant 0 : index
    %c0_3 = arith.constant 0 : index
    %3 = vector.load %arg2[%c0, %c0_1, %c0_2, %c0_3] : memref<1x4x16x128xf32, #tpu.memory_space<vmem>>, vector<1x4x16x128xf32>
    %4 = vector.shape_cast %3 : vector<1x4x16x128xf32> to vector<4x16x128xf32>
    %c0_4 = arith.constant 0 : index
    %c0_5 = arith.constant 0 : index
    %c0_6 = arith.constant 0 : index
    %5 = vector.load %arg3[%c0_4, %c0_5, %c0_6] : memref<1x4x128xf32, #tpu.memory_space<vmem>>, vector<1x4x128xf32>
    %6 = vector.shape_cast %5 : vector<1x4x128xf32> to vector<4x128xf32>
    %cst = arith.constant dense<0.000000e+00> : vector<4x128xf32>
    %7 = vector.multi_reduction <add>, %4, %cst [1] : vector<4x16x128xf32> to vector<4x128xf32>
    %8 = arith.addf %6, %7 : vector<4x128xf32>
    %c0_7 = arith.constant 0 : index
    %c0_8 = arith.constant 0 : index
    %c0_9 = arith.constant 0 : index
    %9 = vector.load %arg3[%c0_7, %c0_8, %c0_9] : memref<1x4x128xf32, #tpu.memory_space<vmem>>, vector<1x4x128xf32>
    %10 = vector.shape_cast %9 : vector<1x4x128xf32> to vector<4x128xf32>
    %11 = vector.shape_cast %8 : vector<4x128xf32> to vector<1x4x128xf32>
    tpu.vector_store %arg3[%c0_7, %c0_8, %c0_9], %11 {strides = array<i32>} : memref<1x4x128xf32, #tpu.memory_space<vmem>>, vector<1x4x128xf32>,
    %c0_10 = arith.constant 0 : index
    %c0_11 = arith.constant 0 : index
    %c0_12 = arith.constant 0 : index
    %12 = vector.load %arg4[%c0_10, %c0_11, %c0_12] : memref<1x4x128xf32, #tpu.memory_space<vmem>>, vector<1x4x128xf32>
    %13 = vector.shape_cast %12 : vector<1x4x128xf32> to vector<4x128xf32>
    %14 = arith.mulf %4, %4 : vector<4x16x128xf32>
    %cst_13 = arith.constant dense<0.000000e+00> : vector<4x128xf32>
    %15 = vector.multi_reduction <add>, %14, %cst_13 [1] : vector<4x16x128xf32> to vector<4x128xf32>
    %16 = arith.addf %13, %15 : vector<4x128xf32>
    %c0_14 = arith.constant 0 : index
    %c0_15 = arith.constant 0 : index
    %c0_16 = arith.constant 0 : index
    %17 = vector.load %arg4[%c0_14, %c0_15, %c0_16] : memref<1x4x128xf32, #tpu.memory_space<vmem>>, vector<1x4x128xf32>
    %18 = vector.shape_cast %17 : vector<1x4x128xf32> to vector<4x128xf32>
    %19 = vector.shape_cast %16 : vector<4x128xf32> to vector<1x4x128xf32>
    tpu.vector_store %arg4[%c0_14, %c0_15, %c0_16], %19 {strides = array<i32>} : memref<1x4x128xf32, #tpu.memory_space<vmem>>, vector<1x4x128xf32>,
    return
  }
  func.func @transform_0(%arg0: i32, %arg1: i32) -> (i32, i32, i32, i32) {
    %c0_i32 = arith.constant 0 : i32
    %c0_i32_0 = arith.constant 0 : i32
    %c0_i32_1 = arith.constant 0 : i32
    return %arg0, %c0_i32, %arg1, %c0_i32_0 : i32, i32, i32, i32
  }
  func.func @transform_1(%arg0: i32, %arg1: i32) -> (i32, i32, i32) {
    %c0_i32 = arith.constant 0 : i32
    %c0_i32_0 = arith.constant 0 : i32
    %c0_i32_1 = arith.constant 0 : i32
    return %arg0, %c0_i32, %c0_i32_0 : i32, i32, i32
  }
  func.func @transform_2(%arg0: i32, %arg1: i32) -> (i32, i32, i32) {
    %c0_i32 = arith.constant 0 : i32
    %c0_i32_0 = arith.constant 0 : i32
    %c0_i32_1 = arith.constant 0 : i32
    return %arg0, %c0_i32, %c0_i32_0 : i32, i32, i32
  }
}

</mosaic_0001>

<llo_original>
// kernel: tpu_custom_call.1
$region0: #{tpu_custom_call.1}
  #allocation0 [shape = 'u32[]', space=smem, size = 0x4, offset = 0x4, fixed_abs, tag = 'smem constant byte address 0x4 - core index']
  #allocation1 [shape = 'u32[144,128]{1,0:T(1,128)}', space=vmem, size = 0x12000, scoped, tag = 'internal scratch']
  %s0 = inlined_call_operand.hbm [shape: f32[2,4,16,128], index: 0, kind: input, shape index: {}]
  %s1 = inlined_call_operand.hbm [shape: f32[2,4,128], index: 1, kind: output, shape index: {0}]
  %s2 = inlined_call_operand.hbm [shape: f32[2,4,128], index: 2, kind: output, shape index: {1}]
  %3 = xla_tuple %s1, %s2
  %s4 = sld [smem:[#allocation0]]
  $region53: #{tpu_custom_call.1} parent=0
    _
  %s6 = ssub.s32 1, %s4
  %s7 = scalar_select 0, %s6, %s4
  $region1: #{tpu_custom_call.1} parent=0
    #allocation2 [shape = 'u8[65536]{0}', space=vmem, size = 0x10000, scoped, tag = 'input window, operand 0']
    #allocation3 [shape = 's32[2]{0}', space=sflag, size = 0x8, scoped, tag = 'scoped memory for tpu_custom_call.1']
    #allocation4 [shape = 's32[2]{0}', space=sflag, size = 0x8, scoped, tag = 'scoped memory for tpu_custom_call.1']
    #allocation5 [shape = 'u8[4096]{0}', space=vmem, size = 0x1000, scoped, tag = 'output window, operand 0']
    #allocation6 [shape = 'u8[4096]{0}', space=vmem, size = 0x1000, scoped, tag = 'output window, operand 1']
    #allocation7 [shape = 's32[2]{0}', space=sflag, size = 0x8, scoped, tag = 'scoped memory for tpu_custom_call.1']
    %8 = vsyncpa [#allocation3], 0
    %s9 = scalar_lea.sflag [#allocation3], 1
    %10 = vsyncpa %s9, 0
    %11 = vsyncpa [#allocation4], 0
    %s12 = scalar_lea.sflag [#allocation4], 1
    %13 = vsyncpa %s12, 0
    %14 = vsyncpa [#allocation7], 0
    %s15 = scalar_lea.sflag [#allocation7], 1
    %16 = vsyncpa %s15, 0
    loop: start=0, step=1, limit=4
    $region2: #{tpu_custom_call.1} parent=1 // loop_pre_header
      _
    $region3: #{tpu_custom_call.1} parent=1 // loop_header
      %s18 = sphi 0, %s22
      %p19 = scmp.ge.s32.totalorder %s18, 4
      %s25 = sphi 0, %s37
      %s26 = sphi 0, %s33
      %s27 = sphi 0, %s25
      %s28 = sphi 0, %s26
      %s29 = sphi 0, %s27
      %s30 = sphi 0, %s28
      %s42 = sphi 0, %s44
      %s45 = sphi 0, %s42
      %s46 = sphi 0, %s45
      %s62 = sphi 0, %s46
      %s68 = sphi 0, %s70
      %s71 = sphi 0, %s68
      %s72 = sphi 0, %s71
      %s88 = sphi 0, %s72
      %s94 = sphi 0, %s96
      %s97 = sphi 0, %s94
      %s98 = sphi 0, %s97
      %s114 = sphi 0, %s98
    $region4: #{tpu_custom_call.1} parent=1 // loop_header_branch
      %21 = sbr.rel (%p19) target = $region8
    $region5: #{tpu_custom_call.1} parent=1 // loop_body
      %s23 = ssub.s32 %s18, 1
      %s24 = ssub.s32 %s18, 2
      %s31 = sadd.s32 1, %s26
      %p32 = scmp.ge.s32.totalorder %s31, 1
      %s33 = scalar_select %p32, 0, %s31
      %s34 = sadd.s32 1, %s25
      %s35 = scalar_select %p32, %s34, %s25
      %p36 = scmp.ge.s32.totalorder %s35, 2
      %s37 = scalar_select %p36, 0, %s35
      %s38 = ssub.s32 %s25, %s37
      %s39 = ssub.s32 %s26, %s33
      %s40 = sor.u32 %s38, %s39
      %p41 = scmp.eq.s32.totalorder %s40, 0
      %s43 = sadd.s32 %s42, 1
      %s44 = scalar_select %p41, %s42, %s43
      %p47 = pneg %p41
      %p48 = scmp.eq.s32.totalorder %s18, 1
      %p49 = por %p47, %p48
      %p50 = scmp.ne.s32.totalorder %s42, %s45
      %p51 = scmp.eq.s32.totalorder %s18, 0
      %p52 = por %p50, %p51
      %p53 = scmp.ne.s32.totalorder %s42, %s45
      %p54 = scmp.eq.s32.totalorder %s23, 1
      %p55 = por %p53, %p54
      %p56 = scmp.ne.s32.totalorder %s45, %s46
      %p57 = scmp.eq.s32.totalorder %s23, 0
      %p58 = por %p56, %p57
      %p59 = scmp.ne.s32.totalorder %s45, %s46
      %p60 = scmp.eq.s32.totalorder %s24, 1
      %p61 = por %p59, %p60
      %p63 = scmp.ne.s32.totalorder %s46, %s62
      %p64 = scmp.eq.s32.totalorder %s24, 0
      %p65 = por %p63, %p64
      %s66 = ssub.s32 %s25, %s37
      %p67 = scmp.eq.s32.totalorder %s66, 0
      %s69 = sadd.s32 %s68, 1
      %s70 = scalar_select %p67, %s68, %s69
      %p73 = pneg %p67
      %p74 = scmp.eq.s32.totalorder %s18, 1
      %p75 = por %p73, %p74
      %p76 = scmp.ne.s32.totalorder %s68, %s71
      %p77 = scmp.eq.s32.totalorder %s18, 0
      %p78 = por %p76, %p77
      %p79 = scmp.ne.s32.totalorder %s68, %s71
      %p80 = scmp.eq.s32.totalorder %s23, 1
      %p81 = por %p79, %p80
      %p82 = scmp.ne.s32.totalorder %s71, %s72
      %p83 = scmp.eq.s32.totalorder %s23, 0
      %p84 = por %p82, %p83
      %p85 = scmp.ne.s32.totalorder %s71, %s72
      %p86 = scmp.eq.s32.totalorder %s24, 1
      %p87 = por %p85, %p86
      %p89 = scmp.ne.s32.totalorder %s72, %s88
      %p90 = scmp.eq.s32.totalorder %s24, 0
      %p91 = por %p89, %p90
      %s92 = ssub.s32 %s25, %s37
      %p93 = scmp.eq.s32.totalorder %s92, 0
      %s95 = sadd.s32 %s94, 1
      %s96 = scalar_select %p93, %s94, %s95
      %p99 = pneg %p93
      %p100 = scmp.eq.s32.totalorder %s18, 1
      %p101 = por %p99, %p100
      %p102 = scmp.ne.s32.totalorder %s94, %s97
      %p103 = scmp.eq.s32.totalorder %s18, 0
      %p104 = por %p102, %p103
      %p105 = scmp.ne.s32.totalorder %s94, %s97
      %p106 = scmp.eq.s32.totalorder %s23, 1
      %p107 = por %p105, %p106
      %p108 = scmp.ne.s32.totalorder %s97, %s98
      %p109 = scmp.eq.s32.totalorder %s23, 0
      %p110 = por %p108, %p109
      %p111 = scmp.ne.s32.totalorder %s97, %s98
      %p112 = scmp.eq.s32.totalorder %s24, 1
      %p113 = por %p111, %p112
      %p115 = scmp.ne.s32.totalorder %s98, %s114
      %p116 = scmp.eq.s32.totalorder %s24, 0
      %p117 = por %p115, %p116
      %p118 = scmp.le.s32.totalorder 1, %s18
      %p119 = scmp.lt.s32.totalorder %s18, 3
      %p120 = pnand %p118, %p119
      %p121 = pneg %p120
      // Predicated region
      $region9: #{tpu_custom_call.1} parent=5 // pred_check
        _
      $region10: #{tpu_custom_call.1} parent=5 // pred_check_branch
        %123 = sbr.rel (%p120) target = $region12
      $region11: #{tpu_custom_call.1} parent=5 // pred_region
        %s124 = ssub.s32 %s18, 1
      $region12: #{tpu_custom_call.1} parent=5 // pred_fallthru
        _
      %p125 = scmp.lt.s32.totalorder %s18, 2
      // Predicated region
      $region13: #{tpu_custom_call.1} parent=5 // pred_check
        %p126 = pneg %p125
      $region14: #{tpu_custom_call.1} parent=5 // pred_check_branch
        %128 = sbr.rel (%p126) target = $region16
      $region15: #{tpu_custom_call.1} parent=5 // pred_region
        // Predicated region
        $region17: #{tpu_custom_call.1} parent=15 // pred_check
          %p129 = pneg %p52
        $region18: #{tpu_custom_call.1} parent=15 // pred_check_branch
          %131 = sbr.rel (%p129) target = $region20
        $region19: #{tpu_custom_call.1} parent=15 // pred_region
          %s132 = sand.u32 %s42, 1
          %s133 = scalar_lea.sflag [#allocation3], %s132
          %s134 = sand.u32 %s42, 1
          %s135 = smul.addr %s134, 64
          %s136 = scalar_lea.vmem [#allocation2], %s135
          %s137 = smul.u32 2, %s26
          %s139 = ssub.s32 1024, 1024
          %140 = vsyncadd %s133, %s139
          %s141 = smul.addr %s25, 8
          %s142 = sadd.s32 %s137, %s141
          %s143 = smul.addr %s142, 128
          %s144 = scalar_lea.hbm %s0, %s143
          %s145 = sshll.u32 %s136, 4
          %s146 = int_to_ptr.vmem [resolvable:$true] %s145
          %151 = dma.hbm_to_vmem [thread:$0]  %s144, 1024, %s146, %s133, 128, 128, 8
        $region20: #{tpu_custom_call.1} parent=15 // pred_fallthru
          _
      $region16: #{tpu_custom_call.1} parent=5 // pred_fallthru
        _
      %p152 = scmp.le.s32.totalorder 1, %s18
      %p153 = scmp.lt.s32.totalorder %s18, 3
      %p154 = pnand %p152, %p153
      %p155 = pneg %p154
      // Predicated region
      $region21: #{tpu_custom_call.1} parent=5 // pred_check
        _
      $region22: #{tpu_custom_call.1} parent=5 // pred_check_branch
        %157 = sbr.rel (%p154) target = $region24
      $region23: #{tpu_custom_call.1} parent=5 // pred_region
        %s158 = ssub.s32 %s18, 1
        %s159 = sand.u32 %s45, 1
        %s160 = scalar_lea.sflag [#allocation3], %s159
        %s161 = sand.u32 %s45, 1
        %s162 = smul.addr %s161, 64
        %s163 = scalar_lea.vmem [#allocation2], %s162
        // Predicated region
        $region25: #{tpu_custom_call.1} parent=23 // pred_check
          %p164 = pneg %p58
        $region26: #{tpu_custom_call.1} parent=23 // pred_check_branch
          %166 = sbr.rel (%p164) target = $region28
        $region27: #{tpu_custom_call.1} parent=23 // pred_region
          %167 = dma.done %s160, 1024
        $region28: #{tpu_custom_call.1} parent=23 // pred_fallthru
          _
        %s168 = sand.u32 %s45, 1
        %s169 = scalar_lea.sflag [#allocation3], %s168
        %s170 = sand.u32 %s45, 1
        %s171 = smul.addr %s170, 64
        %s172 = scalar_lea.vmem [#allocation2], %s171
        %p173 = pneg %p58
        %p174 = pneg %p55
        %p175 = pneg %p84
        %p176 = pneg %p81
        %s177 = sand.u32 %s71, 1
        %s178 = scalar_lea.sflag [#allocation4], %s177
        %s179 = sand.u32 %s71, 1
        %s180 = smul.addr %s179, 4
        %s181 = scalar_lea.vmem [#allocation5], %s180
        %p182 = pneg %p110
        %p183 = pneg %p107
        %s184 = sand.u32 %s97, 1
        %s185 = scalar_lea.sflag [#allocation7], %s184
        %s186 = sand.u32 %s97, 1
        %s187 = smul.addr %s186, 4
        %s188 = scalar_lea.vmem [#allocation6], %s187
        %s189 = smul.u32 2, %s28
        %p190 = scmp.eq.s32.totalorder %s28, 0
        // Predicated region
        $region29: #{tpu_custom_call.1} parent=23 // pred_check
          %p191 = pneg %p190
        $region30: #{tpu_custom_call.1} parent=23 // pred_check_branch
          %193 = sbr.rel (%p191) target = $region32
        $region31: #{tpu_custom_call.1} parent=23 // pred_region
          %194 = vst [vmem:[%s181] sm:$0xf] 0.0
          %195 = vst [vmem:[%s188] sm:$0xf] 0.0
        $region32: #{tpu_custom_call.1} parent=23 // pred_fallthru
          _
        %v196 = vld [vmem:[%s163] sm:$0xff]
        %v197 = vld [vmem:[%s163 + $0x8] sm:$0xff]
        %v198 = vld [vmem:[%s163 + $0x10] sm:$0xff]
        %v199 = vld [vmem:[%s163 + $0x18] sm:$0xff]
        %v200 = vld [vmem:[%s163 + $0x20] sm:$0xff]
        %v201 = vld [vmem:[%s163 + $0x28] sm:$0xff]
        %v202 = vld [vmem:[%s163 + $0x30] sm:$0xff]
        %v203 = vld [vmem:[%s163 + $0x38] sm:$0xff]
        %v204 = vld [vmem:[%s181] sm:$0xf]
        %v205 = vadd.f32 %v196, %v197
        %v206 = vrot.slane %v205, 4
        %v207 = vadd.f32 %v205, %v206
        %v208 = vrot.slane %v207, 2
        %v209 = vadd.f32 %v207, %v208
        %v210 = vrot.slane %v209, 1
        %v211 = vadd.f32 %v209, %v210
        %v212 = vadd.f32 %v198, %v199
        %v213 = vrot.slane %v212, 4
        %v214 = vadd.f32 %v212, %v213
        %v215 = vrot.slane %v214, 2
        %v216 = vadd.f32 %v214, %v215
        %v217 = vrot.slane %v216, 1
        %v218 = vadd.f32 %v216, %v217
        %v219 = vadd.f32 %v200, %v201
        %v220 = vrot.slane %v219, 4
        %v221 = vadd.f32 %v219, %v220
        %v222 = vrot.slane %v221, 2
        %v223 = vadd.f32 %v221, %v222
        %v224 = vrot.slane %v223, 1
        %v225 = vadd.f32 %v223, %v224
        %v226 = vadd.f32 %v202, %v203
        %v227 = vrot.slane %v226, 4
        %v228 = vadd.f32 %v226, %v227
        %v229 = vrot.slane %v228, 2
        %v230 = vadd.f32 %v228, %v229
        %v231 = vrot.slane %v230, 1
        %v232 = vadd.f32 %v230, %v231
        %vm237 = vcmask 1041409
        %v238 = vsel %vm237, %v218, %v211
        %vm239 = vcmask 1042434
        %v240 = vsel %vm239, %v225, %v238
        %vm241 = vcmask 1043459
        %v242 = vsel %vm241, %v232, %v240
        %v244 = vadd.f32 %v204, %v242
        %245 = vst [vmem:[%s181] sm:$0xf] %v244
        %v246 = vld [vmem:[%s188] sm:$0xf]
        %v247 = vmul.f32 %v196, %v196
        %v248 = vmul.f32 %v197, %v197
        %v249 = vmul.f32 %v198, %v198
        %v250 = vmul.f32 %v199, %v199
        %v251 = vmul.f32 %v200, %v200
        %v252 = vmul.f32 %v201, %v201
        %v253 = vmul.f32 %v202, %v202
        %v254 = vmul.f32 %v203, %v203
        %v255 = vadd.f32 %v247, %v248
        %v256 = vrot.slane %v255, 4
        %v257 = vadd.f32 %v255, %v256
        %v258 = vrot.slane %v257, 2
        %v259 = vadd.f32 %v257, %v258
        %v260 = vrot.slane %v259, 1
        %v261 = vadd.f32 %v259, %v260
        %v262 = vadd.f32 %v249, %v250
        %v263 = vrot.slane %v262, 4
        %v264 = vadd.f32 %v262, %v263
        %v265 = vrot.slane %v264, 2
        %v266 = vadd.f32 %v264, %v265
        %v267 = vrot.slane %v266, 1
        %v268 = vadd.f32 %v266, %v267
        %v269 = vadd.f32 %v251, %v252
        %v270 = vrot.slane %v269, 4
        %v271 = vadd.f32 %v269, %v270
        %v272 = vrot.slane %v271, 2
        %v273 = vadd.f32 %v271, %v272
        %v274 = vrot.slane %v273, 1
        %v275 = vadd.f32 %v273, %v274
        %v276 = vadd.f32 %v253, %v254
        %v277 = vrot.slane %v276, 4
        %v278 = vadd.f32 %v276, %v277
        %v279 = vrot.slane %v278, 2
        %v280 = vadd.f32 %v278, %v279
        %v281 = vrot.slane %v280, 1
        %v282 = vadd.f32 %v280, %v281
        %v287 = vsel %vm237, %v268, %v261
        %v288 = vsel %vm239, %v275, %v287
        %v289 = vsel %vm241, %v282, %v288
        %v291 = vadd.f32 %v246, %v289
        %292 = vst [vmem:[%s188] sm:$0xf] %v291
        %s293 = sand.u32 %s71, 1
        %s294 = scalar_lea.sflag [#allocation4], %s293
        %s295 = sand.u32 %s71, 1
        %s296 = smul.addr %s295, 4
        %s297 = scalar_lea.vmem [#allocation5], %s296
        %s298 = sand.u32 %s97, 1
        %s299 = scalar_lea.sflag [#allocation7], %s298
        %s300 = sand.u32 %s97, 1
        %s301 = smul.addr %s300, 4
        %s302 = scalar_lea.vmem [#allocation6], %s301
        // Predicated region
        $region33: #{tpu_custom_call.1} parent=23 // pred_check
          %p303 = pneg %p81
        $region34: #{tpu_custom_call.1} parent=23 // pred_check_branch
          %305 = sbr.rel (%p303) target = $region36
        $region35: #{tpu_custom_call.1} parent=23 // pred_region
          %s307 = ssub.s32 64, 64
          %308 = vsyncadd %s294, %s307
          %s309 = smul.addr %s27, 64
          %s310 = scalar_lea.hbm %s1, %s309
          %s312 = sshll.u32 %s297, 4
          %s313 = int_to_ptr.vmem [resolvable:$true] %s312
          %315 = dma.vmem_to_hbm [thread:$0]  %s313, 64, %s310, %s294
        $region36: #{tpu_custom_call.1} parent=23 // pred_fallthru
          _
        // Predicated region
        $region37: #{tpu_custom_call.1} parent=23 // pred_check
          %p316 = pneg %p107
        $region38: #{tpu_custom_call.1} parent=23 // pred_check_branch
          %318 = sbr.rel (%p316) target = $region40
        $region39: #{tpu_custom_call.1} parent=23 // pred_region
          %s320 = ssub.s32 64, 64
          %321 = vsyncadd %s299, %s320
          %s322 = smul.addr %s27, 64
          %s323 = scalar_lea.hbm %s2, %s322
          %s325 = sshll.u32 %s302, 4
          %s326 = int_to_ptr.vmem [resolvable:$true] %s325
          %328 = dma.vmem_to_hbm [thread:$0]  %s326, 64, %s323, %s299
        $region40: #{tpu_custom_call.1} parent=23 // pred_fallthru
          _
      $region24: #{tpu_custom_call.1} parent=5 // pred_fallthru
        _
      %p329 = scmp.le.s32.totalorder 2, %s18
      // Predicated region
      $region41: #{tpu_custom_call.1} parent=5 // pred_check
        %p330 = pneg %p329
      $region42: #{tpu_custom_call.1} parent=5 // pred_check_branch
        %332 = sbr.rel (%p330) target = $region44
      $region43: #{tpu_custom_call.1} parent=5 // pred_region
        %s333 = ssub.s32 %s18, 2
        // Predicated region
        $region45: #{tpu_custom_call.1} parent=43 // pred_check
          %p334 = pneg %p87
        $region46: #{tpu_custom_call.1} parent=43 // pred_check_branch
          %336 = sbr.rel (%p334) target = $region48
        $region47: #{tpu_custom_call.1} parent=43 // pred_region
          %s337 = sand.u32 %s72, 1
          %s338 = scalar_lea.sflag [#allocation4], %s337
          %s339 = sand.u32 %s72, 1
          %s340 = smul.addr %s339, 4
          %s341 = scalar_lea.vmem [#allocation5], %s340
          %342 = dma.done %s338, 64
        $region48: #{tpu_custom_call.1} parent=43 // pred_fallthru
          _
        // Predicated region
        $region49: #{tpu_custom_call.1} parent=43 // pred_check
          %p343 = pneg %p113
        $region50: #{tpu_custom_call.1} parent=43 // pred_check_branch
          %345 = sbr.rel (%p343) target = $region52
        $region51: #{tpu_custom_call.1} parent=43 // pred_region
          %s346 = sand.u32 %s98, 1
          %s347 = scalar_lea.sflag [#allocation7], %s346
          %s348 = sand.u32 %s98, 1
          %s349 = smul.addr %s348, 4
          %s350 = scalar_lea.vmem [#allocation6], %s349
          %351 = dma.done %s347, 64
        $region52: #{tpu_custom_call.1} parent=43 // pred_fallthru
          _
      $region44: #{tpu_custom_call.1} parent=5 // pred_fallthru
        _
    $region6: #{tpu_custom_call.1} parent=1 // loop_footer
      %s22 = sadd.s32 1, %s18
    $region7: #{tpu_custom_call.1} parent=1 // loop_footer_branch
      %17 = sbr.rel target = $region3
    $region8: #{tpu_custom_call.1} parent=1 // loop_exit
      _
    %352 = vsyncpa [#allocation3], 1
    %s353 = scalar_lea.sflag [#allocation3], 1
    %354 = vsyncpa %s353, 1
    %355 = vsyncpa [#allocation4], 1
    %s356 = scalar_lea.sflag [#allocation4], 1
    %357 = vsyncpa %s356, 1
    %358 = vsyncpa [#allocation7], 1
    %s359 = scalar_lea.sflag [#allocation7], 1
    %360 = vsyncpa %s359, 1

</llo_original>
